<compile_context>
chip_gen: v6e
topology: v6e:2x2x1
jax: 0.10.0
libtpu: 0.0.40
codegen_flags: <defaults>
</compile_context>

<pallas_src>
import functools

import jax
import jax.numpy as jnp
from jax.experimental import pallas as pl
from jax.experimental.pallas import tpu as pltpu

BN_EPS = 1e-5      # torch.nn.BatchNorm1d default
NORM_EPS = 1e-12   # F.normalize default eps
LANE = 128
VMEM_LIMIT = 32 * 1024 * 1024  # safe on v5e(128M)/v6e(128M)/v7x(64M) physical VMEM


def _round_up(v, m):
    return ((v + m - 1) // m) * m


def _pad2d(arr, rows, cols):
    r, c = arr.shape
    return jnp.pad(arr, ((0, rows - r), (0, cols - c)))


# ----------------------------------------------------------------------------
# Kernel 1: SAGEConv (mean aggregation + lin_l + lin_r + L2 normalize), tiled.
# ----------------------------------------------------------------------------
def _sage_conv_kernel(a_ref, xsrc_ref, xdst_ref, wl_ref, bl_ref, wr_ref,
                      o_ref, acc_ref):
    k = pl.program_id(1)

    @pl.when(k == 0)
    def _():
        acc_ref[...] = jnp.zeros_like(acc_ref)

    # mean aggregation:  acc += A[i, k] @ x[k]     (bf16 MXU, f32 accumulate)
    acc_ref[...] += jnp.dot(a_ref[...], xsrc_ref[...],
                            preferred_element_type=jnp.float32)

    @pl.when(k == pl.num_programs(1) - 1)
    def _():
        agg = acc_ref[...]
        # lin_l(agg) + bias + lin_r(x)   (PyG SAGEConv, root_weight=True)
        h = jnp.dot(agg, wl_ref[...], preferred_element_type=jnp.float32)
        h = h + bl_ref[...]
        h = h + jnp.dot(xdst_ref[...], wr_ref[...],
                        preferred_element_type=jnp.float32)
        # F.normalize(h, p=2, dim=-1):  h / max(||h||, eps)  via EUP rsqrt
        ss = jnp.sum(h * h, axis=-1, keepdims=True)
        h = h * jax.lax.rsqrt(jnp.maximum(ss, NORM_EPS * NORM_EPS))
        o_ref[...] = h


def sage_conv(a_bf16, x, wl, bl, wr, *, node_tile=128):
    """One SAGEConv layer.  a_bf16: (Np, Np) bf16, x: (Np, Cin_p) f32."""
    n_pad = a_bf16.shape[0]
    cin_p = x.shape[1]
    cout_p = wl.shape[1]
    tn = tk = node_tile
    r, kt = n_pad // tn, n_pad // tk

    x_src = x.astype(jnp.bfloat16)   # streamed aggregation operand (bf16 MXU)

    flops = int(2 * n_pad * n_pad * cin_p + 4 * n_pad * cin_p * cout_p)
    bytes_accessed = int(2 * n_pad * n_pad + 2 * n_pad * cin_p
                         + 4 * n_pad * cin_p + 4 * n_pad * cout_p
                         + 4 * (2 * cin_p * cout_p + cout_p))
    cost = pl.CostEstimate(flops=flops, transcendentals=int(n_pad),
                           bytes_accessed=bytes_accessed)

    return pl.pallas_call(
        _sage_conv_kernel,
        grid=(r, kt),
        in_specs=[
            pl.BlockSpec((tn, tk), lambda i, k: (i, k)),          # A tile (bf16)
            pl.BlockSpec((tk, cin_p), lambda i, k: (k, 0)),       # x[src] (bf16)
            pl.BlockSpec((tn, cin_p), lambda i, k: (i, 0)),       # x[dst] (f32)
            pl.BlockSpec((cin_p, cout_p), lambda i, k: (0, 0)),   # W_l
            pl.BlockSpec((1, cout_p), lambda i, k: (0, 0)),       # b_l
            pl.BlockSpec((cin_p, cout_p), lambda i, k: (0, 0)),   # W_r
        ],
        out_specs=pl.BlockSpec((tn, cout_p), lambda i, k: (i, 0)),
        out_shape=jax.ShapeDtypeStruct((n_pad, cout_p), jnp.float32),
        scratch_shapes=[pltpu.VMEM((tn, cin_p), jnp.float32)],
        compiler_params=pltpu.CompilerParams(
            dimension_semantics=("parallel", "arbitrary"),
            vmem_limit_bytes=VMEM_LIMIT),
        cost_estimate=cost,
    )(a_bf16, x_src, x, wl, bl, wr)


# ----------------------------------------------------------------------------
# Kernel 2: BatchNorm1d (training-mode batch stats over ALL nodes) + ReLU.
# Two-pass grid: pass 0 accumulates sum / sumsq across row tiles, pass 1 applies.
# ----------------------------------------------------------------------------
def _bn_relu_kernel(h_ref, g_ref, b_ref, o_ref, sum_ref, ssq_ref,
                    *, tile_rows, n_valid, inv_n):
    p = pl.program_id(0)
    i = pl.program_id(1)

    @pl.when(jnp.logical_and(p == 0, i == 0))
    def _():
        sum_ref[...] = jnp.zeros_like(sum_ref)
        ssq_ref[...] = jnp.zeros_like(ssq_ref)

    h = h_ref[...]

    @pl.when(p == 0)
    def _():
        # mask out zero-padded node rows so they don't pollute the statistics
        rows = jax.lax.broadcasted_iota(jnp.int32, h.shape, 0) + i * tile_rows
        hm = jnp.where(rows < n_valid, h, 0.0)
        sum_ref[...] += jnp.sum(hm, axis=0, keepdims=True)
        ssq_ref[...] += jnp.sum(hm * hm, axis=0, keepdims=True)
        o_ref[...] = h   # placeholder write; overwritten in the apply pass

    @pl.when(p == 1)
    def _():
        mu = sum_ref[...] * inv_n
        var = ssq_ref[...] * inv_n - mu * mu          # biased variance
        scale = g_ref[...] * jax.lax.rsqrt(var + BN_EPS)   # fold gamma (EUP rsqrt)
        shift = b_ref[...] - mu * scale
        o_ref[...] = jnp.maximum(h * scale + shift, 0.0)    # ReLU (dropout p=0)


def batchnorm_relu(h, gamma, beta, *, n_valid, node_tile=128):
    n_pad, c_p = h.shape
    tn = node_tile
    r = n_pad // tn
    kernel = functools.partial(_bn_relu_kernel, tile_rows=tn, n_valid=n_valid,
                               inv_n=1.0 / float(n_valid))
    return pl.pallas_call(
        kernel,
        grid=(2, r),
        in_specs=[
            pl.BlockSpec((tn, c_p), lambda p, i: (i, 0)),
            pl.BlockSpec((1, c_p), lambda p, i: (0, 0)),
            pl.BlockSpec((1, c_p), lambda p, i: (0, 0)),
        ],
        out_specs=pl.BlockSpec((tn, c_p), lambda p, i: (i, 0)),
        out_shape=jax.ShapeDtypeStruct((n_pad, c_p), jnp.float32),
        scratch_shapes=[pltpu.VMEM((1, c_p), jnp.float32),
                        pltpu.VMEM((1, c_p), jnp.float32)],
        compiler_params=pltpu.CompilerParams(
            dimension_semantics=("arbitrary", "arbitrary"),
            vmem_limit_bytes=VMEM_LIMIT),
    )(h, gamma, beta)


# ----------------------------------------------------------------------------
# Glue: dense row-normalized mean-aggregation matrix (plain JAX, outside kernel).
# ----------------------------------------------------------------------------
def build_mean_adj(edge_index, num_nodes, n_pad):
    """A[dst, src] = 1 / in_degree(dst); zero rows for isolated / padded nodes."""
    src = edge_index[0]
    dst = edge_index[1]
    a = jnp.zeros((n_pad, n_pad), jnp.float32).at[dst, src].add(1.0)
    deg = jnp.sum(a, axis=1, keepdims=True)
    a = a / jnp.maximum(deg, 1.0)
    return a.astype(jnp.bfloat16)


def init_params(key, in_channels, hidden_channels, out_channels):
    """Synthetic parameters in PyTorch Linear layout pre-transposed to (Cin, Cout).
    lin_l has bias, lin_r has no bias (PyG SAGEConv defaults)."""
    dims = [(in_channels, hidden_channels), (hidden_channels, out_channels)]
    params = []
    for (cin, cout) in dims:
        key, k1, k2, k3 = jax.random.split(key, 4)
        scale = 1.0 / jnp.sqrt(jnp.float32(cin))
        wl = jax.random.uniform(k1, (cin, cout), jnp.float32, -scale, scale)
        bl = jax.random.uniform(k2, (1, cout), jnp.float32, -scale, scale)
        wr = jax.random.uniform(k3, (cin, cout), jnp.float32, -scale, scale)
        params.append({"wl": wl, "bl": bl, "wr": wr})
    bn = {
        "gamma": jnp.ones((1, hidden_channels), jnp.float32),
        "beta": jnp.zeros((1, hidden_channels), jnp.float32),
    }
    return params, bn


def gnn_forward(x, edge_index, params, bn, *, node_tile=128):
    """GNN.forward: SAGEConv -> BN -> ReLU -> (dropout p=0) -> SAGEConv."""
    n, cin = x.shape
    hid = params[0]["wl"].shape[1]
    cout = params[1]["wl"].shape[1]

    n_pad = _round_up(n, node_tile)
    cin_p = _round_up(cin, LANE)
    hid_p = _round_up(hid, LANE)
    cout_p = _round_up(cout, LANE)

    # pad everything once in the wrapper -> lane-dense kernel-facing layout
    x_p = _pad2d(x, n_pad, cin_p)
    wl1 = _pad2d(params[0]["wl"], cin_p, hid_p)
    wr1 = _pad2d(params[0]["wr"], cin_p, hid_p)
    bl1 = _pad2d(params[0]["bl"], 1, hid_p)
    wl2 = _pad2d(params[1]["wl"], hid_p, cout_p)
    wr2 = _pad2d(params[1]["wr"], hid_p, cout_p)
    bl2 = _pad2d(params[1]["bl"], 1, cout_p)
    gamma_p = _pad2d(bn["gamma"], 1, hid_p)
    beta_p = _pad2d(bn["beta"], 1, hid_p)

    a = build_mean_adj(edge_index, n, n_pad)                        # bf16 (Np, Np)

    h = sage_conv(a, x_p, wl1, bl1, wr1, node_tile=node_tile)       # layer 1
    h = batchnorm_relu(h, gamma_p, beta_p, n_valid=n, node_tile=node_tile)
    out = sage_conv(a, h, wl2, bl2, wr2, node_tile=node_tile)       # layer 2
    return out[:n, :cout]


# ----------------------------------------------------------------------------
# Pure-JAX reference (f32 end-to-end) for a sanity check.
# ----------------------------------------------------------------------------
def gnn_reference(x, edge_index, params, bn):
    n = x.shape[0]
    src, dst = edge_index[0], edge_index[1]
    a = jnp.zeros((n, n), jnp.float32).at[dst, src].add(1.0)
    a = a / jnp.maximum(jnp.sum(a, axis=1, keepdims=True), 1.0)

    def conv(x, p):
        h = a @ x @ p["wl"] + p["bl"] + x @ p["wr"]
        nrm = jnp.sqrt(jnp.sum(h * h, axis=-1, keepdims=True))
        return h / jnp.maximum(nrm, NORM_EPS)

    h = conv(x, params[0])
    mu = jnp.mean(h, axis=0, keepdims=True)
    var = jnp.mean((h - mu) ** 2, axis=0, keepdims=True)
    h = (h - mu) * jax.lax.rsqrt(var + BN_EPS) * bn["gamma"] + bn["beta"]
    h = jnp.maximum(h, 0.0)
    return conv(h, params[1])


if __name__ == "__main__":
    # Small deterministic problem: 256 nodes, 1024 edges, 16 -> 32 -> 8 channels
    # (256 nodes gives a 2x2 tile grid so the pipelined/accumulating path runs).
    N, E = 256, 1024
    IN_C, HID_C, OUT_C = 16, 32, 8

    key = jax.random.PRNGKey(0)
    kx, ke, kp = jax.random.split(key, 3)

    x = jax.random.normal(kx, (N, IN_C), dtype=jnp.float32)
    edge_index = jax.random.randint(ke, (2, E), 0, N, dtype=jnp.int32)

    params, bn = init_params(kp, IN_C, HID_C, OUT_C)

    out = gnn_forward(x, edge_index, params, bn)
    out = jax.block_until_ready(out)

    assert out.shape == (N, OUT_C)
    assert bool(jnp.all(jnp.isfinite(out)))

    ref = gnn_reference(x, edge_index, params, bn)
    max_err = float(jnp.max(jnp.abs(out - ref)))
    assert max_err < 5e-2, f"mismatch vs reference: {max_err}"

    print("KERNEL_OK")
</pallas_src>

<mosaic_0001>
module attributes {stable_mosaic.version = 11 : i64} {
  func.func @_sage_conv_kernel(%arg0: i32, %arg1: i32, %arg2: memref<128x128xbf16, #tpu.memory_space<vmem>>, %arg3: memref<128x128xbf16, #tpu.memory_space<vmem>>, %arg4: memref<128x128xf32, #tpu.memory_space<vmem>>, %arg5: memref<128x128xf32, #tpu.memory_space<vmem>>, %arg6: memref<1x128xf32, #tpu.memory_space<vmem>>, %arg7: memref<128x128xf32, #tpu.memory_space<vmem>>, %arg8: memref<128x128xf32, #tpu.memory_space<vmem>>, %arg9: memref<128x128xf32, #tpu.memory_space<vmem>>) attributes {dimension_semantics = [#tpu.dimension_semantics<parallel>, #tpu.dimension_semantics<arbitrary>], iteration_bounds = array<i64: 2, 2>, scalar_prefetch = 0 : i64, scratch_operands = 1 : i64, tpu.core_type = #tpu.core_type<tc>, window_params = [{transform_indices = @transform_0, window_bounds = array<i64: 128, 128>}, {transform_indices = @transform_1, window_bounds = array<i64: 128, 128>}, {transform_indices = @transform_2, window_bounds = array<i64: 128, 128>}, {pipeline_mode = #tpu.pipeline_mode<synchronous>, transform_indices = @transform_3, window_bounds = array<i64: 128, 128>}, {pipeline_mode = #tpu.pipeline_mode<synchronous>, transform_indices = @transform_4, window_bounds = array<i64: 1, 128>}, {pipeline_mode = #tpu.pipeline_mode<synchronous>, transform_indices = @transform_5, window_bounds = array<i64: 128, 128>}, {transform_indices = @transform_6, window_bounds = array<i64: 128, 128>}]} {
    %c0_i32 = arith.constant 0 : i32
    %0 = arith.cmpi eq, %arg1, %c0_i32 : i32
    %1 = arith.extui %0 : i1 to i32
    %c0_i32_0 = arith.constant 0 : i32
    %2 = arith.cmpi ne, %1, %c0_i32_0 : i32
    scf.if %2 {
      %cst_9 = arith.constant 0.000000e+00 : f32
      %12 = vector.broadcast %cst_9 : f32 to vector<128x128xf32>
      %c0_10 = arith.constant 0 : index
      %c0_11 = arith.constant 0 : index
      %13 = vector.load %arg9[%c0_10, %c0_11] : memref<128x128xf32, #tpu.memory_space<vmem>>, vector<128x128xf32>
      tpu.vector_store %arg9[%c0_10, %c0_11], %12 {strides = array<i32>} : memref<128x128xf32, #tpu.memory_space<vmem>>, vector<128x128xf32>,
    } else {
    }
    %c0 = arith.constant 0 : index
    %c0_1 = arith.constant 0 : index
    %3 = vector.load %arg9[%c0, %c0_1] : memref<128x128xf32, #tpu.memory_space<vmem>>, vector<128x128xf32>
    %c0_2 = arith.constant 0 : index
    %c0_3 = arith.constant 0 : index
    %4 = vector.load %arg2[%c0_2, %c0_3] : memref<128x128xbf16, #tpu.memory_space<vmem>>, vector<128x128xbf16>
    %c0_4 = arith.constant 0 : index
    %c0_5 = arith.constant 0 : index
    %5 = vector.load %arg3[%c0_4, %c0_5] : memref<128x128xbf16, #tpu.memory_space<vmem>>, vector<128x128xbf16>
    %cst = arith.constant dense<0.000000e+00> : vector<128x128xf32>
    %6 = tpu.matmul %4, %5, %cst {dimension_numbers = #tpu.dot_dimension_numbers<[1], [0], [0], [1], [0, 0, 1, 1], [], []>} : vector<128x128xbf16>, vector<128x128xbf16>, vector<128x128xf32> -> vector<128x128xf32>
    %7 = arith.addf %3, %6 : vector<128x128xf32>
    %c0_6 = arith.constant 0 : index
    %c0_7 = arith.constant 0 : index
    %8 = vector.load %arg9[%c0_6, %c0_7] : memref<128x128xf32, #tpu.memory_space<vmem>>, vector<128x128xf32>
    tpu.vector_store %arg9[%c0_6, %c0_7], %7 {strides = array<i32>} : memref<128x128xf32, #tpu.memory_space<vmem>>, vector<128x128xf32>,
    %c1_i32 = arith.constant 1 : i32
    %9 = arith.cmpi eq, %arg1, %c1_i32 : i32
    %10 = arith.extui %9 : i1 to i32
    %c0_i32_8 = arith.constant 0 : i32
    %11 = arith.cmpi ne, %10, %c0_i32_8 : i32
    scf.if %11 {
      %c0_9 = arith.constant 0 : index
      %c0_10 = arith.constant 0 : index
      %12 = vector.load %arg9[%c0_9, %c0_10] : memref<128x128xf32, #tpu.memory_space<vmem>>, vector<128x128xf32>
      %c0_11 = arith.constant 0 : index
      %c0_12 = arith.constant 0 : index
      %13 = vector.load %arg5[%c0_11, %c0_12] : memref<128x128xf32, #tpu.memory_space<vmem>>, vector<128x128xf32>
      %cst_13 = arith.constant dense<0.000000e+00> : vector<128x128xf32>
      %14 = tpu.matmul %12, %13, %cst_13 {dimension_numbers = #tpu.dot_dimension_numbers<[1], [0], [0], [1], [0, 0, 1, 1], [], []>} : vector<128x128xf32>, vector<128x128xf32>, vector<128x128xf32> -> vector<128x128xf32>
      %c0_14 = arith.constant 0 : index
      %c0_15 = arith.constant 0 : index
      %15 = vector.load %arg6[%c0_14, %c0_15] : memref<1x128xf32, #tpu.memory_space<vmem>>, vector<1x128xf32>
      %16 = vector.broadcast %15 : vector<1x128xf32> to vector<128x128xf32>
      %17 = arith.addf %14, %16 : vector<128x128xf32>
      %c0_16 = arith.constant 0 : index
      %c0_17 = arith.constant 0 : index
      %18 = vector.load %arg4[%c0_16, %c0_17] : memref<128x128xf32, #tpu.memory_space<vmem>>, vector<128x128xf32>
      %c0_18 = arith.constant 0 : index
      %c0_19 = arith.constant 0 : index
      %19 = vector.load %arg7[%c0_18, %c0_19] : memref<128x128xf32, #tpu.memory_space<vmem>>, vector<128x128xf32>
      %cst_20 = arith.constant dense<0.000000e+00> : vector<128x128xf32>
      %20 = tpu.matmul %18, %19, %cst_20 {dimension_numbers = #tpu.dot_dimension_numbers<[1], [0], [0], [1], [0, 0, 1, 1], [], []>} : vector<128x128xf32>, vector<128x128xf32>, vector<128x128xf32> -> vector<128x128xf32>
      %21 = arith.addf %17, %20 : vector<128x128xf32>
      %22 = arith.mulf %21, %21 : vector<128x128xf32>
      %cst_21 = arith.constant dense<0.000000e+00> : vector<128xf32>
      %23 = vector.multi_reduction <add>, %22, %cst_21 [1] : vector<128x128xf32> to vector<128xf32>
      %24 = vector.shape_cast %23 : vector<128xf32> to vector<128x1xf32>
      %cst_22 = arith.constant 1.000000e-24 : f32
      %25 = vector.broadcast %cst_22 : f32 to vector<128x1xf32>
      %26 = arith.maximumf %24, %25 : vector<128x1xf32>
      %27 = math.rsqrt %26 : vector<128x1xf32>
      %28 = vector.broadcast %27 : vector<128x1xf32> to vector<128x128xf32>
      %29 = arith.mulf %21, %28 : vector<128x128xf32>
      %c0_23 = arith.constant 0 : index
      %c0_24 = arith.constant 0 : index
      %30 = vector.load %arg8[%c0_23, %c0_24] : memref<128x128xf32, #tpu.memory_space<vmem>>, vector<128x128xf32>
      tpu.vector_store %arg8[%c0_23, %c0_24], %29 {strides = array<i32>} : memref<128x128xf32, #tpu.memory_space<vmem>>, vector<128x128xf32>,
    } else {
    }
    return
  }
  func.func @transform_0(%arg0: i32, %arg1: i32) -> (i32, i32) {
    %c0_i32 = arith.constant 0 : i32
    return %arg0, %arg1 : i32, i32
  }
  func.func @transform_1(%arg0: i32, %arg1: i32) -> (i32, i32) {
    %c0_i32 = arith.constant 0 : i32
    %c0_i32_0 = arith.constant 0 : i32
    return %arg1, %c0_i32 : i32, i32
  }
  func.func @transform_2(%arg0: i32, %arg1: i32) -> (i32, i32) {
    %c0_i32 = arith.constant 0 : i32
    %c0_i32_0 = arith.constant 0 : i32
    return %arg0, %c0_i32 : i32, i32
  }
  func.func @transform_3(%arg0: i32, %arg1: i32) -> (i32, i32) {
    %c0_i32 = arith.constant 0 : i32
    %c0_i32_0 = arith.constant 0 : i32
    %c0_i32_1 = arith.constant 0 : i32
    return %c0_i32, %c0_i32_0 : i32, i32
  }
  func.func @transform_4(%arg0: i32, %arg1: i32) -> (i32, i32) {
    %c0_i32 = arith.constant 0 : i32
    %c0_i32_0 = arith.constant 0 : i32
    %c0_i32_1 = arith.constant 0 : i32
    return %c0_i32, %c0_i32_0 : i32, i32
  }
  func.func @transform_5(%arg0: i32, %arg1: i32) -> (i32, i32) {
    %c0_i32 = arith.constant 0 : i32
    %c0_i32_0 = arith.constant 0 : i32
    %c0_i32_1 = arith.constant 0 : i32
    return %c0_i32, %c0_i32_0 : i32, i32
  }
  func.func @transform_6(%arg0: i32, %arg1: i32) -> (i32, i32) {
    %c0_i32 = arith.constant 0 : i32
    %c0_i32_0 = arith.constant 0 : i32
    return %arg0, %c0_i32 : i32, i32
  }
}

</mosaic_0001>

<llo_original>
// kernel: tpu_custom_call.1
$region0: #{tpu_custom_call.1}
  #allocation0 [shape = 'u32[]', space=smem, size = 0x4, offset = 0x4, fixed_abs, tag = 'smem constant byte address 0x4 - core index']
  #allocation1 [shape = 'u32[144,128]{1,0:T(1,128)}', space=vmem, size = 0x12000, scoped, tag = 'internal scratch']
  #allocation2 [shape = 'f32[128,128]{1,0:T(8,128)}', space=vmem, size = 0x10000, scoped, tag = 'scratch operand']
  %s0 = inlined_call_operand.hbm [shape: bf16[256,256], index: 0, kind: input, shape index: {}]
  %s1 = inlined_call_operand.hbm [shape: bf16[256,128], index: 1, kind: input, shape index: {}]
  %s2 = inlined_call_operand.hbm [shape: f32[256,128], index: 2, kind: input, shape index: {}]
  %s3 = inlined_call_operand.hbm [shape: f32[128,128], index: 3, kind: input, shape index: {}]
  %s4 = inlined_call_operand.vmem [shape: f32[1,128], index: 4, kind: input, shape index: {}]
  %s5 = inlined_call_operand.hbm [shape: f32[128,128], index: 5, kind: input, shape index: {}]
  %s6 = inlined_call_operand.hbm [shape: f32[256,128], index: 6, kind: output, shape index: {}]
  %s7 = sld [smem:[#allocation0]]
  $region85: #{tpu_custom_call.1} parent=0
    _
  %s9 = ssub.s32 1, %s7
  %s10 = scalar_select 0, %s9, %s7
  $region1: #{tpu_custom_call.1} parent=0
    #allocation3 [shape = 'u8[65536]{0}', space=vmem, size = 0x10000, scoped, tag = 'input window, operand 0']
    #allocation4 [shape = 's32[2]{0}', space=sflag, size = 0x8, scoped, tag = 'scoped memory for tpu_custom_call.1']
    #allocation5 [shape = 's32[2]{0}', space=sflag, size = 0x8, scoped, tag = 'scoped memory for tpu_custom_call.1']
    #allocation6 [shape = 'u8[65536]{0}', space=vmem, size = 0x10000, scoped, tag = 'input window, operand 1']
    #allocation7 [shape = 's32[2]{0}', space=sflag, size = 0x8, scoped, tag = 'scoped memory for tpu_custom_call.1']
    #allocation8 [shape = 'u8[131072]{0}', space=vmem, size = 0x20000, scoped, tag = 'input window, operand 2']
    #allocation9 [shape = 'u8[65536]{0}', space=vmem, size = 0x10000, scoped, tag = 'input window, operand 3, single buffered']
    #allocation10 [shape = 's32[1]{0}', space=sflag, size = 0x4, scoped, tag = 'scoped memory for tpu_custom_call.1']
    #allocation11 [shape = 'u8[65536]{0}', space=vmem, size = 0x10000, scoped, tag = 'input window, operand 5, single buffered']
    #allocation12 [shape = 'u8[131072]{0}', space=vmem, size = 0x20000, scoped, tag = 'output window, operand 0']
    %11 = vsyncpa [#allocation4], 0
    %s12 = scalar_lea.sflag [#allocation4], 1
    %13 = vsyncpa %s12, 0
    %14 = vsyncpa [#allocation7], 0
    %s15 = scalar_lea.sflag [#allocation7], 1
    %16 = vsyncpa %s15, 0
    %17 = vsyncpa [#allocation10], 0
    %18 = vsyncpa [#allocation5], 0
    %s19 = scalar_lea.sflag [#allocation5], 1
    %20 = vsyncpa %s19, 0
    loop: start=0, step=1, limit=6
    $region2: #{tpu_custom_call.1} parent=1 // loop_pre_header
      _
    $region3: #{tpu_custom_call.1} parent=1 // loop_header
      %s22 = sphi 0, %s26
      %p23 = scmp.ge.s32.totalorder %s22, 6
      %s29 = sphi 0, %s41
      %s30 = sphi 0, %s37
      %s31 = sphi 0, %s29
      %s32 = sphi 0, %s30
      %s33 = sphi 0, %s31
      %s34 = sphi 0, %s32
      %s46 = sphi 0, %s48
      %s49 = sphi 0, %s46
      %s50 = sphi 0, %s49
      %s66 = sphi 0, %s50
      %s72 = sphi 0, %s74
      %s75 = sphi 0, %s72
      %s76 = sphi 0, %s75
      %s92 = sphi 0, %s76
      %s98 = sphi 0, %s100
      %s101 = sphi 0, %s98
      %s102 = sphi 0, %s101
      %s118 = sphi 0, %s102
      %s122 = sphi 0, %s122
      %s124 = sphi 0, %s122
      %s125 = sphi 0, %s124
      %s139 = sphi 0, %s125
      %s143 = sphi 0, %s143
      %s145 = sphi 0, %s143
      %s146 = sphi 0, %s145
      %s160 = sphi 0, %s146
      %s164 = sphi 0, %s164
      %s166 = sphi 0, %s164
      %s167 = sphi 0, %s166
      %s181 = sphi 0, %s167
      %s187 = sphi 0, %s189
      %s190 = sphi 0, %s187
      %s191 = sphi 0, %s190
      %s207 = sphi 0, %s191
    $region4: #{tpu_custom_call.1} parent=1 // loop_header_branch
      %25 = sbr.rel (%p23) target = $region8
    $region5: #{tpu_custom_call.1} parent=1 // loop_body
      %s27 = ssub.s32 %s22, 1
      %s28 = ssub.s32 %s22, 2
      %s35 = sadd.s32 1, %s30
      %p36 = scmp.ge.s32.totalorder %s35, 2
      %s37 = scalar_select %p36, 0, %s35
      %s38 = sadd.s32 1, %s29
      %s39 = scalar_select %p36, %s38, %s29
      %p40 = scmp.ge.s32.totalorder %s39, 2
      %s41 = scalar_select %p40, 0, %s39
      %s42 = ssub.s32 %s29, %s41
      %s43 = ssub.s32 %s30, %s37
      %s44 = sor.u32 %s42, %s43
      %p45 = scmp.eq.s32.totalorder %s44, 0
      %s47 = sadd.s32 %s46, 1
      %s48 = scalar_select %p45, %s46, %s47
      %p51 = pneg %p45
      %p52 = scmp.eq.s32.totalorder %s22, 3
      %p53 = por %p51, %p52
      %p54 = scmp.ne.s32.totalorder %s46, %s49
      %p55 = scmp.eq.s32.totalorder %s22, 0
      %p56 = por %p54, %p55
      %p57 = scmp.ne.s32.totalorder %s46, %s49
      %p58 = scmp.eq.s32.totalorder %s27, 3
      %p59 = por %p57, %p58
      %p60 = scmp.ne.s32.totalorder %s49, %s50
      %p61 = scmp.eq.s32.totalorder %s27, 0
      %p62 = por %p60, %p61
      %p63 = scmp.ne.s32.totalorder %s49, %s50
      %p64 = scmp.eq.s32.totalorder %s28, 3
      %p65 = por %p63, %p64
      %p67 = scmp.ne.s32.totalorder %s50, %s66
      %p68 = scmp.eq.s32.totalorder %s28, 0
      %p69 = por %p67, %p68
      %s70 = ssub.s32 %s30, %s37
      %p71 = scmp.eq.s32.totalorder %s70, 0
      %s73 = sadd.s32 %s72, 1
      %s74 = scalar_select %p71, %s72, %s73
      %p77 = pneg %p71
      %p78 = scmp.eq.s32.totalorder %s22, 3
      %p79 = por %p77, %p78
      %p80 = scmp.ne.s32.totalorder %s72, %s75
      %p81 = scmp.eq.s32.totalorder %s22, 0
      %p82 = por %p80, %p81
      %p83 = scmp.ne.s32.totalorder %s72, %s75
      %p84 = scmp.eq.s32.totalorder %s27, 3
      %p85 = por %p83, %p84
      %p86 = scmp.ne.s32.totalorder %s75, %s76
      %p87 = scmp.eq.s32.totalorder %s27, 0
      %p88 = por %p86, %p87
      %p89 = scmp.ne.s32.totalorder %s75, %s76
      %p90 = scmp.eq.s32.totalorder %s28, 3
      %p91 = por %p89, %p90
      %p93 = scmp.ne.s32.totalorder %s76, %s92
      %p94 = scmp.eq.s32.totalorder %s28, 0
      %p95 = por %p93, %p94
      %s96 = ssub.s32 %s29, %s41
      %p97 = scmp.eq.s32.totalorder %s96, 0
      %s99 = sadd.s32 %s98, 1
      %s100 = scalar_select %p97, %s98, %s99
      %p103 = pneg %p97
      %p104 = scmp.eq.s32.totalorder %s22, 3
      %p105 = por %p103, %p104
      %p106 = scmp.ne.s32.totalorder %s98, %s101
      %p107 = scmp.eq.s32.totalorder %s22, 0
      %p108 = por %p106, %p107
      %p109 = scmp.ne.s32.totalorder %s98, %s101
      %p110 = scmp.eq.s32.totalorder %s27, 3
      %p111 = por %p109, %p110
      %p112 = scmp.ne.s32.totalorder %s101, %s102
      %p113 = scmp.eq.s32.totalorder %s27, 0
      %p114 = por %p112, %p113
      %p115 = scmp.ne.s32.totalorder %s101, %s102
      %p116 = scmp.eq.s32.totalorder %s28, 3
      %p117 = por %p115, %p116
      %p119 = scmp.ne.s32.totalorder %s102, %s118
      %p120 = scmp.eq.s32.totalorder %s28, 0
      %p121 = por %p119, %p120
      %s123 = sadd.s32 %s122, 1
      %p126 = scmp.eq.s32.totalorder %s22, 3
      %p127 = scmp.ne.s32.totalorder %s122, %s124
      %p128 = scmp.eq.s32.totalorder %s22, 0
      %p129 = por %p127, %p128
      %p130 = scmp.ne.s32.totalorder %s122, %s124
      %p131 = scmp.eq.s32.totalorder %s27, 3
      %p132 = por %p130, %p131
      %p133 = scmp.ne.s32.totalorder %s124, %s125
      %p134 = scmp.eq.s32.totalorder %s27, 0
      %p135 = por %p133, %p134
      %p136 = scmp.ne.s32.totalorder %s124, %s125
      %p137 = scmp.eq.s32.totalorder %s28, 3
      %p138 = por %p136, %p137
      %p140 = scmp.ne.s32.totalorder %s125, %s139
      %p141 = scmp.eq.s32.totalorder %s28, 0
      %p142 = por %p140, %p141
      %s144 = sadd.s32 %s143, 1
      %p147 = scmp.eq.s32.totalorder %s22, 3
      %p148 = scmp.ne.s32.totalorder %s143, %s145
      %p149 = scmp.eq.s32.totalorder %s22, 0
      %p150 = por %p148, %p149
      %p151 = scmp.ne.s32.totalorder %s143, %s145
      %p152 = scmp.eq.s32.totalorder %s27, 3
      %p153 = por %p151, %p152
      %p154 = scmp.ne.s32.totalorder %s145, %s146
      %p155 = scmp.eq.s32.totalorder %s27, 0
      %p156 = por %p154, %p155
      %p157 = scmp.ne.s32.totalorder %s145, %s146
      %p158 = scmp.eq.s32.totalorder %s28, 3
      %p159 = por %p157, %p158
      %p161 = scmp.ne.s32.totalorder %s146, %s160
      %p162 = scmp.eq.s32.totalorder %s28, 0
      %p163 = por %p161, %p162
      %s165 = sadd.s32 %s164, 1
      %p168 = scmp.eq.s32.totalorder %s22, 3
      %p169 = scmp.ne.s32.totalorder %s164, %s166
      %p170 = scmp.eq.s32.totalorder %s22, 0
      %p171 = por %p169, %p170
      %p172 = scmp.ne.s32.totalorder %s164, %s166
      %p173 = scmp.eq.s32.totalorder %s27, 3
      %p174 = por %p172, %p173
      %p175 = scmp.ne.s32.totalorder %s166, %s167
      %p176 = scmp.eq.s32.totalorder %s27, 0
      %p177 = por %p175, %p176
      %p178 = scmp.ne.s32.totalorder %s166, %s167
      %p179 = scmp.eq.s32.totalorder %s28, 3
      %p180 = por %p178, %p179
      %p182 = scmp.ne.s32.totalorder %s167, %s181
      %p183 = scmp.eq.s32.totalorder %s28, 0
      %p184 = por %p182, %p183
      %s185 = ssub.s32 %s29, %s41
      %p186 = scmp.eq.s32.totalorder %s185, 0
      %s188 = sadd.s32 %s187, 1
      %s189 = scalar_select %p186, %s187, %s188
      %p192 = pneg %p186
      %p193 = scmp.eq.s32.totalorder %s22, 3
      %p194 = por %p192, %p193
      %p195 = scmp.ne.s32.totalorder %s187, %s190
      %p196 = scmp.eq.s32.totalorder %s22, 0
      %p197 = por %p195, %p196
      %p198 = scmp.ne.s32.totalorder %s187, %s190
      %p199 = scmp.eq.s32.totalorder %s27, 3
      %p200 = por %p198, %p199
      %p201 = scmp.ne.s32.totalorder %s190, %s191
      %p202 = scmp.eq.s32.totalorder %s27, 0
      %p203 = por %p201, %p202
      %p204 = scmp.ne.s32.totalorder %s190, %s191
      %p205 = scmp.eq.s32.totalorder %s28, 3
      %p206 = por %p204, %p205
      %p208 = scmp.ne.s32.totalorder %s191, %s207
      %p209 = scmp.eq.s32.totalorder %s28, 0
      %p210 = por %p208, %p209
      %p211 = scmp.le.s32.totalorder 1, %s22
      %p212 = scmp.lt.s32.totalorder %s22, 5
      %p213 = pnand %p211, %p212
      %p214 = pneg %p213
      // Predicated region
      $region9: #{tpu_custom_call.1} parent=5 // pred_check
        _
      $region10: #{tpu_custom_call.1} parent=5 // pred_check_branch
        %216 = sbr.rel (%p213) target = $region12
      $region11: #{tpu_custom_call.1} parent=5 // pred_region
        %s217 = ssub.s32 %s22, 1
        // Predicated region
        $region13: #{tpu_custom_call.1} parent=11 // pred_check
          %p218 = pneg %p135
        $region14: #{tpu_custom_call.1} parent=11 // pred_check_branch
          %220 = sbr.rel (%p218) target = $region16
        $region15: #{tpu_custom_call.1} parent=11 // pred_region
          %s222 = ssub.s32 2048, 2048
          %223 = vsyncadd [#allocation10], %s222
          %s224 = sshll.u32 [#allocation9], 4
          %s225 = int_to_ptr.vmem [resolvable:$true] %s224
          %230 = dma.hbm_to_vmem [thread:$0]  %s3, 2048, %s225, [#allocation10], 128, 128, 8
        $region16: #{tpu_custom_call.1} parent=11 // pred_fallthru
          _
        // Predicated region
        $region17: #{tpu_custom_call.1} parent=11 // pred_check
          %p231 = pneg %p156
        $region18: #{tpu_custom_call.1} parent=11 // pred_check_branch
          %233 = sbr.rel (%p231) target = $region20
        $region19: #{tpu_custom_call.1} parent=11 // pred_region
          _
        $region20: #{tpu_custom_call.1} parent=11 // pred_fallthru
          _
        // Predicated region
        $region21: #{tpu_custom_call.1} parent=11 // pred_check
          %p234 = pneg %p177
        $region22: #{tpu_custom_call.1} parent=11 // pred_check_branch
          %236 = sbr.rel (%p234) target = $region24
        $region23: #{tpu_custom_call.1} parent=11 // pred_region
          %s238 = ssub.s32 2048, 2048
          %239 = vsyncadd [#allocation10], %s238
          %s240 = sshll.u32 [#allocation11], 4
          %s241 = int_to_ptr.vmem [resolvable:$true] %s240
          %246 = dma.hbm_to_vmem [thread:$0]  %s5, 2048, %s241, [#allocation10], 128, 128, 8
        $region24: #{tpu_custom_call.1} parent=11 // pred_fallthru
          _
      $region12: #{tpu_custom_call.1} parent=5 // pred_fallthru
        _
      %p247 = scmp.lt.s32.totalorder %s22, 4
      // Predicated region
      $region25: #{tpu_custom_call.1} parent=5 // pred_check
        %p248 = pneg %p247
      $region26: #{tpu_custom_call.1} parent=5 // pred_check_branch
        %250 = sbr.rel (%p248) target = $region28
      $region27: #{tpu_custom_call.1} parent=5 // pred_region
        // Predicated region
        $region29: #{tpu_custom_call.1} parent=27 // pred_check
          %p251 = pneg %p56
        $region30: #{tpu_custom_call.1} parent=27 // pred_check_branch
          %253 = sbr.rel (%p251) target = $region32
        $region31: #{tpu_custom_call.1} parent=27 // pred_region
          %s254 = sand.u32 %s46, 1
          %s255 = scalar_lea.sflag [#allocation4], %s254
          %s256 = sand.u32 %s46, 1
          %s257 = smul.addr %s256, 64
          %s258 = scalar_lea.vmem [#allocation3], %s257
          %s259 = smul.u32 16, %s29
          %s261 = ssub.s32 1024, 1024
          %262 = vsyncadd %s255, %s261
          %s263 = smul.addr %s259, 2
          %s264 = sadd.s32 %s30, %s263
          %s265 = smul.addr %s264, 64
          %s266 = scalar_lea.hbm %s0, %s265
          %s267 = sshll.u32 %s258, 4
          %s268 = int_to_ptr.vmem [resolvable:$true] %s267
          %273 = dma.hbm_to_vmem [thread:$0]  %s266, 1024, %s268, %s255, 128, 64, 4
        $region32: #{tpu_custom_call.1} parent=27 // pred_fallthru
          _
        // Predicated region
        $region33: #{tpu_custom_call.1} parent=27 // pred_check
          %p274 = pneg %p82
        $region34: #{tpu_custom_call.1} parent=27 // pred_check_branch
          %276 = sbr.rel (%p274) target = $region36
        $region35: #{tpu_custom_call.1} parent=27 // pred_region
          %s277 = sand.u32 %s22, 1
          %s278 = scalar_lea.sflag [#allocation7], %s277
          %s279 = sand.u32 %s72, 1
          %s280 = smul.addr %s279, 64
          %s281 = scalar_lea.vmem [#allocation6], %s280
          %s282 = smul.u32 16, %s30
          %s284 = ssub.s32 1024, 1024
          %285 = vsyncadd %s278, %s284
          %s286 = smul.addr %s282, 64
          %s287 = scalar_lea.hbm %s1, %s286
          %s288 = sshll.u32 %s281, 4
          %s289 = int_to_ptr.vmem [resolvable:$true] %s288
          %294 = dma.hbm_to_vmem [thread:$0]  %s287, 1024, %s289, %s278, 64, 64, 4
        $region36: #{tpu_custom_call.1} parent=27 // pred_fallthru
          _
        // Predicated region
        $region37: #{tpu_custom_call.1} parent=27 // pred_check
          %p295 = pneg %p108
        $region38: #{tpu_custom_call.1} parent=27 // pred_check_branch
          %297 = sbr.rel (%p295) target = $region40
        $region39: #{tpu_custom_call.1} parent=27 // pred_region
          %s298 = sand.u32 %s22, 1
          %s299 = scalar_lea.sflag [#allocation7], %s298
          %s300 = sand.u32 %s98, 1
          %s301 = smul.addr %s300, 128
          %s302 = scalar_lea.vmem [#allocation8], %s301
          %s303 = smul.u32 16, %s29
          %s305 = ssub.s32 2048, 2048
          %306 = vsyncadd %s299, %s305
          %s307 = smul.addr %s303, 128
          %s308 = scalar_lea.hbm %s2, %s307
          %s309 = sshll.u32 %s302, 4
          %s310 = int_to_ptr.vmem [resolvable:$true] %s309
          %315 = dma.hbm_to_vmem [thread:$0]  %s308, 2048, %s310, %s299, 128, 128, 8
        $region40: #{tpu_custom_call.1} parent=27 // pred_fallthru
          _
      $region28: #{tpu_custom_call.1} parent=5 // pred_fallthru
        _
      %p316 = scmp.le.s32.totalorder 1, %s22
      %p317 = scmp.lt.s32.totalorder %s22, 5
      %p318 = pnand %p316, %p317
      %p319 = pneg %p318
      // Predicated region
      $region41: #{tpu_custom_call.1} parent=5 // pred_check
        _
      $region42: #{tpu_custom_call.1} parent=5 // pred_check_branch
        %321 = sbr.rel (%p318) target = $region44
      $region43: #{tpu_custom_call.1} parent=5 // pred_region
        %s322 = ssub.s32 %s22, 1
        %s323 = sand.u32 %s49, 1
        %s324 = scalar_lea.sflag [#allocation4], %s323
        %s325 = sand.u32 %s49, 1
        %s326 = smul.addr %s325, 64
        %s327 = scalar_lea.vmem [#allocation3], %s326
        // Predicated region
        $region45: #{tpu_custom_call.1} parent=43 // pred_check
          %p328 = pneg %p62
        $region46: #{tpu_custom_call.1} parent=43 // pred_check_branch
          %330 = sbr.rel (%p328) target = $region48
        $region47: #{tpu_custom_call.1} parent=43 // pred_region
          %331 = dma.done %s324, 1024
        $region48: #{tpu_custom_call.1} parent=43 // pred_fallthru
          _
        %s332 = sand.u32 %s27, 1
        %s333 = scalar_lea.sflag [#allocation7], %s332
        %s334 = sand.u32 %s75, 1
        %s335 = smul.addr %s334, 64
        %s336 = scalar_lea.vmem [#allocation6], %s335
        // Predicated region
        $region49: #{tpu_custom_call.1} parent=43 // pred_check
          %p337 = pneg %p88
        $region50: #{tpu_custom_call.1} parent=43 // pred_check_branch
          %339 = sbr.rel (%p337) target = $region52
        $region51: #{tpu_custom_call.1} parent=43 // pred_region
          %340 = dma.done %s333, 1024
        $region52: #{tpu_custom_call.1} parent=43 // pred_fallthru
          _
        %s341 = sand.u32 %s27, 1
        %s342 = scalar_lea.sflag [#allocation7], %s341
        %s343 = sand.u32 %s101, 1
        %s344 = smul.addr %s343, 128
        %s345 = scalar_lea.vmem [#allocation8], %s344
        // Predicated region
        $region53: #{tpu_custom_call.1} parent=43 // pred_check
          %p346 = pneg %p114
        $region54: #{tpu_custom_call.1} parent=43 // pred_check_branch
          %348 = sbr.rel (%p346) target = $region56
        $region55: #{tpu_custom_call.1} parent=43 // pred_region
          %349 = dma.done %s342, 2048
        $region56: #{tpu_custom_call.1} parent=43 // pred_fallthru
          _
        // Predicated region
        $region57: #{tpu_custom_call.1} parent=43 // pred_check
          %p350 = pneg %p135
        $region58: #{tpu_custom_call.1} parent=43 // pred_check_branch
          %352 = sbr.rel (%p350) target = $region60
        $region59: #{tpu_custom_call.1} parent=43 // pred_region
          %353 = dma.done [#allocation10], 2048
        $region60: #{tpu_custom_call.1} parent=43 // pred_fallthru
          _
        // Predicated region
        $region61: #{tpu_custom_call.1} parent=43 // pred_check
          %p354 = pneg %p177
        $region62: #{tpu_custom_call.1} parent=43 // pred_check_branch
          %356 = sbr.rel (%p354) target = $region64
        $region63: #{tpu_custom_call.1} parent=43 // pred_region
          %357 = dma.done [#allocation10], 2048
        $region64: #{tpu_custom_call.1} parent=43 // pred_fallthru
          _
        %s358 = sand.u32 %s49, 1
        %s359 = scalar_lea.sflag [#allocation4], %s358
        %s360 = sand.u32 %s49, 1
        %s361 = smul.addr %s360, 64
        %s362 = scalar_lea.vmem [#allocation3], %s361
        %p363 = pneg %p62
        %p364 = pneg %p59
        %s365 = sand.u32 %s27, 1
        %s366 = scalar_lea.sflag [#allocation7], %s365
        %s367 = sand.u32 %s75, 1
        %s368 = smul.addr %s367, 64
        %s369 = scalar_lea.vmem [#allocation6], %s368
        %p370 = pneg %p88
        %p371 = pneg %p85
        %s372 = sand.u32 %s27, 1
        %s373 = scalar_lea.sflag [#allocation7], %s372
        %s374 = sand.u32 %s101, 1
        %s375 = smul.addr %s374, 128
        %s376 = scalar_lea.vmem [#allocation8], %s375
        %p377 = pneg %p114
        %p378 = pneg %p111
        %p379 = pneg %p135
        %p380 = pneg %p132
        %p381 = pneg %p156
        %p382 = pneg %p153
        %p383 = pneg %p177
        %p384 = pneg %p174
        %p385 = pneg %p203
        %p386 = pneg %p200
        %s387 = sand.u32 %s190, 1
        %s388 = scalar_lea.sflag [#allocation5], %s387
        %s389 = sand.u32 %s190, 1
        %s390 = smul.addr %s389, 128
        %s391 = scalar_lea.vmem [#allocation12], %s390
        %s392 = smul.u32 16, %s31
        %s393 = smul.u32 16, %s32
        %s394 = smul.u32 16, %s31
        %s395 = smul.u32 16, %s31
        %p397 = scmp.eq.s32.totalorder %s32, 0
        // Predicated region
        $region65: #{tpu_custom_call.1} parent=43 // pred_check
          %p398 = pneg %p397
        $region66: #{tpu_custom_call.1} parent=43 // pred_check_branch
          %400 = sbr.rel (%p398) target = $region68
        $region67: #{tpu_custom_call.1} parent=43 // pred_region
          %401 = vst [vmem:[#allocation2] sm:$0xff] 0.0
          %402 = vst [vmem:[#allocation2 + $0x8] sm:$0xff] 0.0
          %403 = vst [vmem:[#allocation2 + $0x10] sm:$0xff] 0.0
          %404 = vst [vmem:[#allocation2 + $0x18] sm:$0xff] 0.0
          %405 = vst [vmem:[#allocation2 + $0x20] sm:$0xff] 0.0
          %406 = vst [vmem:[#allocation2 + $0x28] sm:$0xff] 0.0
          %407 = vst [vmem:[#allocation2 + $0x30] sm:$0xff] 0.0
          %408 = vst [vmem:[#allocation2 + $0x38] sm:$0xff] 0.0
          %409 = vst [vmem:[#allocation2 + $0x40] sm:$0xff] 0.0
          %410 = vst [vmem:[#allocation2 + $0x48] sm:$0xff] 0.0
          %411 = vst [vmem:[#allocation2 + $0x50] sm:$0xff] 0.0
          %412 = vst [vmem:[#allocation2 + $0x58] sm:$0xff] 0.0
          %413 = vst [vmem:[#allocation2 + $0x60] sm:$0xff] 0.0
          %414 = vst [vmem:[#allocation2 + $0x68] sm:$0xff] 0.0
          %415 = vst [vmem:[#allocation2 + $0x70] sm:$0xff] 0.0
          %416 = vst [vmem:[#allocation2 + $0x78] sm:$0xff] 0.0
        $region68: #{tpu_custom_call.1} parent=43 // pred_fallthru
          _
        %v417 = vld [vmem:[#allocation2] sm:$0xff]
        %v418 = vld [vmem:[#allocation2 + $0x8] sm:$0xff]
        %v419 = vld [vmem:[#allocation2 + $0x10] sm:$0xff]
        %v420 = vld [vmem:[#allocation2 + $0x18] sm:$0xff]
        %v421 = vld [vmem:[#allocation2 + $0x20] sm:$0xff]
        %v422 = vld [vmem:[#allocation2 + $0x28] sm:$0xff]
        %v423 = vld [vmem:[#allocation2 + $0x30] sm:$0xff]
        %v424 = vld [vmem:[#allocation2 + $0x38] sm:$0xff]
        %v425 = vld [vmem:[#allocation2 + $0x40] sm:$0xff]
        %v426 = vld [vmem:[#allocation2 + $0x48] sm:$0xff]
        %v427 = vld [vmem:[#allocation2 + $0x50] sm:$0xff]
        %v428 = vld [vmem:[#allocation2 + $0x58] sm:$0xff]
        %v429 = vld [vmem:[#allocation2 + $0x60] sm:$0xff]
        %v430 = vld [vmem:[#allocation2 + $0x68] sm:$0xff]
        %v431 = vld [vmem:[#allocation2 + $0x70] sm:$0xff]
        %v432 = vld [vmem:[#allocation2 + $0x78] sm:$0xff]
        %v433 = vld [vmem:[%s327] sm:$0xf]
        %v434 = vld [vmem:[%s327 + $0x4] sm:$0xf]
        %v435 = vld [vmem:[%s327 + $0x8] sm:$0xf]
        %v436 = vld [vmem:[%s327 + $0xc] sm:$0xf]
        %v437 = vld [vmem:[%s327 + $0x10] sm:$0xf]
        %v438 = vld [vmem:[%s327 + $0x14] sm:$0xf]
        %v439 = vld [vmem:[%s327 + $0x18] sm:$0xf]
        %v440 = vld [vmem:[%s327 + $0x1c] sm:$0xf]
        %v441 = vld [vmem:[%s327 + $0x20] sm:$0xf]
        %v442 = vld [vmem:[%s327 + $0x24] sm:$0xf]
        %v443 = vld [vmem:[%s327 + $0x28] sm:$0xf]
        %v444 = vld [vmem:[%s327 + $0x2c] sm:$0xf]
        %v445 = vld [vmem:[%s327 + $0x30] sm:$0xf]
        %v446 = vld [vmem:[%s327 + $0x34] sm:$0xf]
        %v447 = vld [vmem:[%s327 + $0x38] sm:$0xf]
        %v448 = vld [vmem:[%s327 + $0x3c] sm:$0xf]
        %v449 = vld [vmem:[%s336] sm:$0xf]
        %v450 = vld [vmem:[%s336 + $0x4] sm:$0xf]
        %v451 = vld [vmem:[%s336 + $0x8] sm:$0xf]
        %v452 = vld [vmem:[%s336 + $0xc] sm:$0xf]
        %v453 = vld [vmem:[%s336 + $0x10] sm:$0xf]
        %v454 = vld [vmem:[%s336 + $0x14] sm:$0xf]
        %v455 = vld [vmem:[%s336 + $0x18] sm:$0xf]
        %v456 = vld [vmem:[%s336 + $0x1c] sm:$0xf]
        %v457 = vld [vmem:[%s336 + $0x20] sm:$0xf]
        %v458 = vld [vmem:[%s336 + $0x24] sm:$0xf]
        %v459 = vld [vmem:[%s336 + $0x28] sm:$0xf]
        %v460 = vld [vmem:[%s336 + $0x2c] sm:$0xf]
        %v461 = vld [vmem:[%s336 + $0x30] sm:$0xf]
        %v462 = vld [vmem:[%s336 + $0x34] sm:$0xf]
        %v463 = vld [vmem:[%s336 + $0x38] sm:$0xf]
        %v464 = vld [vmem:[%s336 + $0x3c] sm:$0xf]
        %v481 = vunpack.c.l.b16 %v433
        %v482 = vunpack.c.l.b16 %v434
        %v483 = vunpack.c.l.b16 %v435
        %v484 = vunpack.c.l.b16 %v436
        %v485 = vunpack.c.l.b16 %v437
        %v486 = vunpack.c.l.b16 %v438
        %v487 = vunpack.c.l.b16 %v439
        %v488 = vunpack.c.l.b16 %v440
        %v489 = vunpack.c.l.b16 %v441
        %v490 = vunpack.c.l.b16 %v442
        %v491 = vunpack.c.l.b16 %v443
        %v492 = vunpack.c.l.b16 %v444
        %v493 = vunpack.c.l.b16 %v445
        %v494 = vunpack.c.l.b16 %v446
        %v495 = vunpack.c.l.b16 %v447
        %v496 = vunpack.c.l.b16 %v448
        %v497 = vpack.c.b16 %v482, %v481
        %v498 = vpack.c.b16 %v484, %v483
        %v499 = vpack.c.b16 %v486, %v485
        %v500 = vpack.c.b16 %v488, %v487
        %v501 = vpack.c.b16 %v490, %v489
        %v502 = vpack.c.b16 %v492, %v491
        %v503 = vpack.c.b16 %v494, %v493
        %v504 = vpack.c.b16 %v496, %v495
        %v529 = vunpack.c.l.b16 %v449
        %v530 = vunpack.c.l.b16 %v450
        %v531 = vunpack.c.l.b16 %v451
        %v532 = vunpack.c.l.b16 %v452
        %v533 = vunpack.c.l.b16 %v453
        %v534 = vunpack.c.l.b16 %v454
        %v535 = vunpack.c.l.b16 %v455
        %v536 = vunpack.c.l.b16 %v456
        %v537 = vunpack.c.l.b16 %v457
        %v538 = vunpack.c.l.b16 %v458
        %v539 = vunpack.c.l.b16 %v459
        %v540 = vunpack.c.l.b16 %v460
        %v541 = vunpack.c.l.b16 %v461
        %v542 = vunpack.c.l.b16 %v462
        %v543 = vunpack.c.l.b16 %v463
        %v544 = vunpack.c.l.b16 %v464
        %v545 = vpack.c.b16 %v530, %v529
        %v546 = vpack.c.b16 %v532, %v531
        %v547 = vpack.c.b16 %v534, %v533
        %v548 = vpack.c.b16 %v536, %v535
        %v549 = vpack.c.b16 %v538, %v537
        %v550 = vpack.c.b16 %v540, %v539
        %v551 = vpack.c.b16 %v542, %v541
        %v552 = vpack.c.b16 %v544, %v543
        %561 = vmatprep.subr.bf16.mxu0 0
        %562 = vmatpush1.bf16.msra.mxu0 %v552
        %563 = vmatprep.subr.bf16.mxu0 0
        %564 = vmatpush1.bf16.msra.mxu0 %v551
        %565 = vmatprep.subr.bf16.mxu0 0
        %566 = vmatpush1.bf16.msra.mxu0 %v550
        %567 = vmatprep.subr.bf16.mxu0 0
        %568 = vmatpush1.bf16.msra.mxu0 %v549
        %569 = vmatprep.subr.bf16.mxu0 0
        %570 = vmatpush1.bf16.msra.mxu0 %v548
        %571 = vmatprep.subr.bf16.mxu0 0
        %572 = vmatpush1.bf16.msra.mxu0 %v547
        %573 = vmatprep.subr.bf16.mxu0 0
        %574 = vmatpush1.bf16.msra.mxu0 %v546
        %575 = vmatprep.subr.bf16.mxu0 0
        %576 = vmatpush1.bf16.msra.mxu0 %v545
        %577 = vmatprep.subr.bf16.mxu0 0
        %578 = vmatpush2.bf16.msra.mxu0 0
        %579 = vmatprep.subr.bf16.mxu0 0
        %580 = vmatpush2.bf16.msra.mxu0 0
        %581 = vmatprep.subr.bf16.mxu0 0
        %582 = vmatpush2.bf16.msra.mxu0 0
        %583 = vmatprep.subr.bf16.mxu0 0
        %584 = vmatpush2.bf16.msra.mxu0 0
        %585 = vmatprep.subr.bf16.mxu0 0
        %586 = vmatpush2.bf16.msra.mxu0 0
        %587 = vmatprep.subr.bf16.mxu0 0
        %588 = vmatpush2.bf16.msra.mxu0 0
        %589 = vmatprep.subr.bf16.mxu0 0
        %590 = vmatpush2.bf16.msra.mxu0 0
        %591 = vmatprep.subr.bf16.mxu0 0
        %592 = vmatpush2.bf16.msra.mxu0 0
        %593 = vmatprep.mubr.bf16.mxu0 0
        %594 = vmatmul.mubr.bf16.gmra.mxu0 %v497
        %v595 = vpop.f32.mrf.mxu0
        %v596 = vadd.f32 0.0, %v595
        %v597 = vpop.f32.mrf.mxu0
        %v598 = vpop.f32.mrf.mxu0
        %v599 = vadd.f32 0.0, %v598
        %v600 = vpop.f32.mrf.mxu0
        %601 = vmatprep.mubr.bf16.mxu0 0
        %602 = vmatmul.mubr.bf16.gmra.mxu0 %v498
        %v603 = vpop.f32.mrf.mxu0
        %v604 = vadd.f32 0.0, %v603
        %v605 = vpop.f32.mrf.mxu0
        %v606 = vpop.f32.mrf.mxu0
        %v607 = vadd.f32 0.0, %v606
        %v608 = vpop.f32.mrf.mxu0
        %609 = vmatprep.mubr.bf16.mxu0 0
        %610 = vmatmul.mubr.bf16.gmra.mxu0 %v499
        %v611 = vpop.f32.mrf.mxu0
        %v612 = vadd.f32 0.0, %v611
        %v613 = vpop.f32.mrf.mxu0
        %v614 = vpop.f32.mrf.mxu0
        %v615 = vadd.f32 0.0, %v614
        %v616 = vpop.f32.mrf.mxu0
        %617 = vmatprep.mubr.bf16.mxu0 0
        %618 = vmatmul.mubr.bf16.gmra.mxu0 %v500
        %v619 = vpop.f32.mrf.mxu0
        %v620 = vadd.f32 0.0, %v619
        %v621 = vpop.f32.mrf.mxu0
        %v622 = vpop.f32.mrf.mxu0
        %v623 = vadd.f32 0.0, %v622
        %v624 = vpop.f32.mrf.mxu0
        %625 = vmatprep.mubr.bf16.mxu0 0
        %626 = vmatmul.mubr.bf16.gmra.mxu0 %v501
        %v627 = vpop.f32.mrf.mxu0
        %v628 = vadd.f32 0.0, %v627
        %v629 = vpop.f32.mrf.mxu0
        %v630 = vpop.f32.mrf.mxu0
        %v631 = vadd.f32 0.0, %v630
        %v632 = vpop.f32.mrf.mxu0
        %633 = vmatprep.mubr.bf16.mxu0 0
        %634 = vmatmul.mubr.bf16.gmra.mxu0 %v502
        %v635 = vpop.f32.mrf.mxu0
        %v636 = vadd.f32 0.0, %v635
        %v637 = vpop.f32.mrf.mxu0
        %v638 = vpop.f32.mrf.mxu0
        %v639 = vadd.f32 0.0, %v638
        %v640 = vpop.f32.mrf.mxu0
        %641 = vmatprep.mubr.bf16.mxu0 0
        %642 = vmatmul.mubr.bf16.gmra.mxu0 %v503
        %v643 = vpop.f32.mrf.mxu0
        %v644 = vadd.f32 0.0, %v643
        %v645 = vpop.f32.mrf.mxu0
        %v646 = vpop.f32.mrf.mxu0
        %v647 = vadd.f32 0.0, %v646
        %v648 = vpop.f32.mrf.mxu0
        %649 = vmatprep.mubr.bf16.mxu0 0
        %650 = vmatmul.mubr.bf16.gmra.mxu0 %v504
        %v651 = vpop.f32.mrf.mxu0
        %v652 = vadd.f32 0.0, %v651
        %v653 = vpop.f32.mrf.mxu0
        %v654 = vpop.f32.mrf.mxu0
        %v655 = vadd.f32 0.0, %v654
        %v656 = vpop.f32.mrf.mxu0
        %657 = vdwg.mxu0
        %v658 = vadd.f32 %v417, %v596
        %v659 = vadd.f32 %v418, %v599
        %v660 = vadd.f32 %v419, %v604
        %v661 = vadd.f32 %v420, %v607
        %v662 = vadd.f32 %v421, %v612
        %v663 = vadd.f32 %v422, %v615
        %v664 = vadd.f32 %v423, %v620
        %v665 = vadd.f32 %v424, %v623
        %v666 = vadd.f32 %v425, %v628
        %v667 = vadd.f32 %v426, %v631
        %v668 = vadd.f32 %v427, %v636
        %v669 = vadd.f32 %v428, %v639
        %v670 = vadd.f32 %v429, %v644
        %v671 = vadd.f32 %v430, %v647
        %v672 = vadd.f32 %v431, %v652
        %v673 = vadd.f32 %v432, %v655
        %674 = vst [vmem:[#allocation2] sm:$0xff] %v658
        %675 = vst [vmem:[#allocation2 + $0x8] sm:$0xff] %v659
        %676 = vst [vmem:[#allocation2 + $0x10] sm:$0xff] %v660
        %677 = vst [vmem:[#allocation2 + $0x18] sm:$0xff] %v661
        %678 = vst [vmem:[#allocation2 + $0x20] sm:$0xff] %v662
        %679 = vst [vmem:[#allocation2 + $0x28] sm:$0xff] %v663
        %680 = vst [vmem:[#allocation2 + $0x30] sm:$0xff] %v664
        %681 = vst [vmem:[#allocation2 + $0x38] sm:$0xff] %v665
        %682 = vst [vmem:[#allocation2 + $0x40] sm:$0xff] %v666
        %683 = vst [vmem:[#allocation2 + $0x48] sm:$0xff] %v667
        %684 = vst [vmem:[#allocation2 + $0x50] sm:$0xff] %v668
        %685 = vst [vmem:[#allocation2 + $0x58] sm:$0xff] %v669
        %686 = vst [vmem:[#allocation2 + $0x60] sm:$0xff] %v670
        %687 = vst [vmem:[#allocation2 + $0x68] sm:$0xff] %v671
        %688 = vst [vmem:[#allocation2 + $0x70] sm:$0xff] %v672
        %689 = vst [vmem:[#allocation2 + $0x78] sm:$0xff] %v673
        %p690 = scmp.eq.s32.totalorder %s32, 1
        // Predicated region
        $region69: #{tpu_custom_call.1} parent=43 // pred_check
          %p691 = pneg %p690
        $region70: #{tpu_custom_call.1} parent=43 // pred_check_branch
          %693 = sbr.rel (%p691) target = $region72
        $region71: #{tpu_custom_call.1} parent=43 // pred_region
          %v694 = vld [vmem:[#allocation2] sm:$0xff]
          %v695 = vld [vmem:[#allocation2 + $0x8] sm:$0xff]
          %v696 = vld [vmem:[#allocation2 + $0x10] sm:$0xff]
          %v697 = vld [vmem:[#allocation2 + $0x18] sm:$0xff]
          %v698 = vld [vmem:[#allocation2 + $0x20] sm:$0xff]
          %v699 = vld [vmem:[#allocation2 + $0x28] sm:$0xff]
          %v700 = vld [vmem:[#allocation2 + $0x30] sm:$0xff]
          %v701 = vld [vmem:[#allocation2 + $0x38] sm:$0xff]
          %v702 = vld [vmem:[#allocation2 + $0x40] sm:$0xff]
          %v703 = vld [vmem:[#allocation2 + $0x48] sm:$0xff]
          %v704 = vld [vmem:[#allocation2 + $0x50] sm:$0xff]
          %v705 = vld [vmem:[#allocation2 + $0x58] sm:$0xff]
          %v706 = vld [vmem:[#allocation2 + $0x60] sm:$0xff]
          %v707 = vld [vmem:[#allocation2 + $0x68] sm:$0xff]
          %v708 = vld [vmem:[#allocation2 + $0x70] sm:$0xff]
          %v709 = vld [vmem:[#allocation2 + $0x78] sm:$0xff]
          %v710 = vld [vmem:[#allocation9] sm:$0xff]
          %v711 = vld [vmem:[#allocation9 + $0x8] sm:$0xff]
          %v712 = vld [vmem:[#allocation9 + $0x10] sm:$0xff]
          %v713 = vld [vmem:[#allocation9 + $0x18] sm:$0xff]
          %v714 = vld [vmem:[#allocation9 + $0x20] sm:$0xff]
          %v715 = vld [vmem:[#allocation9 + $0x28] sm:$0xff]
          %v716 = vld [vmem:[#allocation9 + $0x30] sm:$0xff]
          %v717 = vld [vmem:[#allocation9 + $0x38] sm:$0xff]
          %v718 = vld [vmem:[#allocation9 + $0x40] sm:$0xff]
          %v719 = vld [vmem:[#allocation9 + $0x48] sm:$0xff]
          %v720 = vld [vmem:[#allocation9 + $0x50] sm:$0xff]
          %v721 = vld [vmem:[#allocation9 + $0x58] sm:$0xff]
          %v722 = vld [vmem:[#allocation9 + $0x60] sm:$0xff]
          %v723 = vld [vmem:[#allocation9 + $0x68] sm:$0xff]
          %v724 = vld [vmem:[#allocation9 + $0x70] sm:$0xff]
          %v725 = vld [vmem:[#allocation9 + $0x78] sm:$0xff]
          %v726 = vld [vmem:[%s4] sm:$0x1]
          %v728 = vlaneseq
          %v729 = vshrl.u32 %v728, 7
          %v730 = vsub.s32 0, %v729
          %v731 = vrot.slane %v726, %v730
          %733 = vmatprep.subr.mxu0 0.0
          %734 = vmatpush1.msra.mxu0 %v725
          %735 = vmatprep.subr.mxu0 0.0
          %736 = vmatpush1.msra.mxu0 %v724
          %737 = vmatprep.subr.mxu0 0.0
          %738 = vmatpush1.msra.mxu0 %v723
          %739 = vmatprep.subr.mxu0 0.0
          %740 = vmatpush1.msra.mxu0 %v722
          %741 = vmatprep.subr.mxu0 0.0
          %742 = vmatpush1.msra.mxu0 %v721
          %743 = vmatprep.subr.mxu0 0.0
          %744 = vmatpush1.msra.mxu0 %v720
          %745 = vmatprep.subr.mxu0 0.0
          %746 = vmatpush1.msra.mxu0 %v719
          %747 = vmatprep.subr.mxu0 0.0
          %748 = vmatpush1.msra.mxu0 %v718
          %749 = vmatprep.subr.mxu0 0.0
          %750 = vmatpush1.msra.mxu0 %v717
          %751 = vmatprep.subr.mxu0 0.0
          %752 = vmatpush1.msra.mxu0 %v716
          %753 = vmatprep.subr.mxu0 0.0
          %754 = vmatpush1.msra.mxu0 %v715
          %755 = vmatprep.subr.mxu0 0.0
          %756 = vmatpush1.msra.mxu0 %v714
          %757 = vmatprep.subr.mxu0 0.0
          %758 = vmatpush1.msra.mxu0 %v713
          %759 = vmatprep.subr.mxu0 0.0
          %760 = vmatpush1.msra.mxu0 %v712
          %761 = vmatprep.subr.mxu0 0.0
          %762 = vmatpush1.msra.mxu0 %v711
          %763 = vmatprep.subr.mxu0 0.0
          %764 = vmatpush1.msra.mxu0 %v710
          %765 = vmatprep.subr.mxu0 0.0
          %766 = vmatpush2.msra.mxu0 0.0
          %767 = vmatprep.subr.mxu0 0.0
          %768 = vmatpush2.msra.mxu0 0.0
          %769 = vmatprep.subr.mxu0 0.0
          %770 = vmatpush2.msra.mxu0 0.0
          %771 = vmatprep.subr.mxu0 0.0
          %772 = vmatpush2.msra.mxu0 0.0
          %773 = vmatprep.subr.mxu0 0.0
          %774 = vmatpush2.msra.mxu0 0.0
          %775 = vmatprep.subr.mxu0 0.0
          %776 = vmatpush2.msra.mxu0 0.0
          %777 = vmatprep.subr.mxu0 0.0
          %778 = vmatpush2.msra.mxu0 0.0
          %779 = vmatprep.subr.mxu0 0.0
          %780 = vmatpush2.msra.mxu0 0.0
          %781 = vmatprep.subr.mxu0 0.0
          %782 = vmatpush2.msra.mxu0 0.0
          %783 = vmatprep.subr.mxu0 0.0
          %784 = vmatpush2.msra.mxu0 0.0
          %785 = vmatprep.subr.mxu0 0.0
          %786 = vmatpush2.msra.mxu0 0.0
          %787 = vmatprep.subr.mxu0 0.0
          %788 = vmatpush2.msra.mxu0 0.0
          %789 = vmatprep.subr.mxu0 0.0
          %790 = vmatpush2.msra.mxu0 0.0
          %791 = vmatprep.subr.mxu0 0.0
          %792 = vmatpush2.msra.mxu0 0.0
          %793 = vmatprep.subr.mxu0 0.0
          %794 = vmatpush2.msra.mxu0 0.0
          %795 = vmatprep.subr.mxu0 0.0
          %796 = vmatpush2.msra.mxu0 0.0
          %797 = vmatprep.mubr.f32.mxu0 0.0
          %798 = vmatmul.mubr.f32.gmra.mxu0 %v694
          %v799 = vpop.f32.mrf.mxu0
          %v800 = vadd.f32 %v731, %v799
          %v801 = vpop.f32.mrf.mxu0
          %802 = vmatprep.mubr.f32.mxu0 0.0
          %803 = vmatmul.mubr.f32.gmra.mxu0 %v695
          %v804 = vpop.f32.mrf.mxu0
          %v805 = vadd.f32 %v731, %v804
          %v806 = vpop.f32.mrf.mxu0
          %807 = vmatprep.mubr.f32.mxu0 0.0
          %808 = vmatmul.mubr.f32.gmra.mxu0 %v696
          %v809 = vpop.f32.mrf.mxu0
          %v810 = vadd.f32 %v731, %v809
          %v811 = vpop.f32.mrf.mxu0
          %812 = vmatprep.mubr.f32.mxu0 0.0
          %813 = vmatmul.mubr.f32.gmra.mxu0 %v697
          %v814 = vpop.f32.mrf.mxu0
          %v815 = vadd.f32 %v731, %v814
          %v816 = vpop.f32.mrf.mxu0
          %817 = vmatprep.mubr.f32.mxu0 0.0
          %818 = vmatmul.mubr.f32.gmra.mxu0 %v698
          %v819 = vpop.f32.mrf.mxu0
          %v820 = vadd.f32 %v731, %v819
          %v821 = vpop.f32.mrf.mxu0
          %822 = vmatprep.mubr.f32.mxu0 0.0
          %823 = vmatmul.mubr.f32.gmra.mxu0 %v699
          %v824 = vpop.f32.mrf.mxu0
          %v825 = vadd.f32 %v731, %v824
          %v826 = vpop.f32.mrf.mxu0
          %827 = vmatprep.mubr.f32.mxu0 0.0
          %828 = vmatmul.mubr.f32.gmra.mxu0 %v700
          %v829 = vpop.f32.mrf.mxu0
          %v830 = vadd.f32 %v731, %v829
          %v831 = vpop.f32.mrf.mxu0
          %832 = vmatprep.mubr.f32.mxu0 0.0
          %833 = vmatmul.mubr.f32.gmra.mxu0 %v701
          %v834 = vpop.f32.mrf.mxu0
          %v835 = vadd.f32 %v731, %v834
          %v836 = vpop.f32.mrf.mxu0
          %837 = vmatprep.mubr.f32.mxu0 0.0
          %838 = vmatmul.mubr.f32.gmra.mxu0 %v702
          %v839 = vpop.f32.mrf.mxu0
          %v840 = vadd.f32 %v731, %v839
          %v841 = vpop.f32.mrf.mxu0
          %842 = vmatprep.mubr.f32.mxu0 0.0
          %843 = vmatmul.mubr.f32.gmra.mxu0 %v703
          %v844 = vpop.f32.mrf.mxu0
          %v845 = vadd.f32 %v731, %v844
          %v846 = vpop.f32.mrf.mxu0
          %847 = vmatprep.mubr.f32.mxu0 0.0
          %848 = vmatmul.mubr.f32.gmra.mxu0 %v704
          %v849 = vpop.f32.mrf.mxu0
          %v850 = vadd.f32 %v731, %v849
          %v851 = vpop.f32.mrf.mxu0
          %852 = vmatprep.mubr.f32.mxu0 0.0
          %853 = vmatmul.mubr.f32.gmra.mxu0 %v705
          %v854 = vpop.f32.mrf.mxu0
          %v855 = vadd.f32 %v731, %v854
          %v856 = vpop.f32.mrf.mxu0
          %857 = vmatprep.mubr.f32.mxu0 0.0
          %858 = vmatmul.mubr.f32.gmra.mxu0 %v706
          %v859 = vpop.f32.mrf.mxu0
          %v860 = vadd.f32 %v731, %v859
          %v861 = vpop.f32.mrf.mxu0
          %862 = vmatprep.mubr.f32.mxu0 0.0
          %863 = vmatmul.mubr.f32.gmra.mxu0 %v707
          %v864 = vpop.f32.mrf.mxu0
          %v865 = vadd.f32 %v731, %v864
          %v866 = vpop.f32.mrf.mxu0
          %867 = vmatprep.mubr.f32.mxu0 0.0
          %868 = vmatmul.mubr.f32.gmra.mxu0 %v708
          %v869 = vpop.f32.mrf.mxu0
          %v870 = vadd.f32 %v731, %v869
          %v871 = vpop.f32.mrf.mxu0
          %872 = vmatprep.mubr.f32.mxu0 0.0
          %873 = vmatmul.mubr.f32.gmra.mxu0 %v709
          %v874 = vpop.f32.mrf.mxu0
          %v875 = vadd.f32 %v731, %v874
          %v876 = vpop.f32.mrf.mxu0
          %877 = vdwg.mxu0
          %v878 = vld [vmem:[%s345] sm:$0xff]
          %v879 = vld [vmem:[%s345 + $0x8] sm:$0xff]
          %v880 = vld [vmem:[%s345 + $0x10] sm:$0xff]
          %v881 = vld [vmem:[%s345 + $0x18] sm:$0xff]
          %v882 = vld [vmem:[%s345 + $0x20] sm:$0xff]
          %v883 = vld [vmem:[%s345 + $0x28] sm:$0xff]
          %v884 = vld [vmem:[%s345 + $0x30] sm:$0xff]
          %v885 = vld [vmem:[%s345 + $0x38] sm:$0xff]
          %v886 = vld [vmem:[%s345 + $0x40] sm:$0xff]
          %v887 = vld [vmem:[%s345 + $0x48] sm:$0xff]
          %v888 = vld [vmem:[%s345 + $0x50] sm:$0xff]
          %v889 = vld [vmem:[%s345 + $0x58] sm:$0xff]
          %v890 = vld [vmem:[%s345 + $0x60] sm:$0xff]
          %v891 = vld [vmem:[%s345 + $0x68] sm:$0xff]
          %v892 = vld [vmem:[%s345 + $0x70] sm:$0xff]
          %v893 = vld [vmem:[%s345 + $0x78] sm:$0xff]
          %v894 = vld [vmem:[#allocation11] sm:$0xff]
          %v895 = vld [vmem:[#allocation11 + $0x8] sm:$0xff]
          %v896 = vld [vmem:[#allocation11 + $0x10] sm:$0xff]
          %v897 = vld [vmem:[#allocation11 + $0x18] sm:$0xff]
          %v898 = vld [vmem:[#allocation11 + $0x20] sm:$0xff]
          %v899 = vld [vmem:[#allocation11 + $0x28] sm:$0xff]
          %v900 = vld [vmem:[#allocation11 + $0x30] sm:$0xff]
          %v901 = vld [vmem:[#allocation11 + $0x38] sm:$0xff]
          %v902 = vld [vmem:[#allocation11 + $0x40] sm:$0xff]
          %v903 = vld [vmem:[#allocation11 + $0x48] sm:$0xff]
          %v904 = vld [vmem:[#allocation11 + $0x50] sm:$0xff]
          %v905 = vld [vmem:[#allocation11 + $0x58] sm:$0xff]
          %v906 = vld [vmem:[#allocation11 + $0x60] sm:$0xff]
          %v907 = vld [vmem:[#allocation11 + $0x68] sm:$0xff]
          %v908 = vld [vmem:[#allocation11 + $0x70] sm:$0xff]
          %v909 = vld [vmem:[#allocation11 + $0x78] sm:$0xff]
          %910 = vmatprep.subr.mxu0 0.0
          %911 = vmatpush1.msra.mxu0 %v909
          %912 = vmatprep.subr.mxu0 0.0
          %913 = vmatpush1.msra.mxu0 %v908
          %914 = vmatprep.subr.mxu0 0.0
          %915 = vmatpush1.msra.mxu0 %v907
          %916 = vmatprep.subr.mxu0 0.0
          %917 = vmatpush1.msra.mxu0 %v906
          %918 = vmatprep.subr.mxu0 0.0
          %919 = vmatpush1.msra.mxu0 %v905
          %920 = vmatprep.subr.mxu0 0.0
          %921 = vmatpush1.msra.mxu0 %v904
          %922 = vmatprep.subr.mxu0 0.0
          %923 = vmatpush1.msra.mxu0 %v903
          %924 = vmatprep.subr.mxu0 0.0
          %925 = vmatpush1.msra.mxu0 %v902
          %926 = vmatprep.subr.mxu0 0.0
          %927 = vmatpush1.msra.mxu0 %v901
          %928 = vmatprep.subr.mxu0 0.0
          %929 = vmatpush1.msra.mxu0 %v900
          %930 = vmatprep.subr.mxu0 0.0
          %931 = vmatpush1.msra.mxu0 %v899
          %932 = vmatprep.subr.mxu0 0.0
          %933 = vmatpush1.msra.mxu0 %v898
          %934 = vmatprep.subr.mxu0 0.0
          %935 = vmatpush1.msra.mxu0 %v897
          %936 = vmatprep.subr.mxu0 0.0
          %937 = vmatpush1.msra.mxu0 %v896
          %938 = vmatprep.subr.mxu0 0.0
          %939 = vmatpush1.msra.mxu0 %v895
          %940 = vmatprep.subr.mxu0 0.0
          %941 = vmatpush1.msra.mxu0 %v894
          %942 = vmatprep.subr.mxu0 0.0
          %943 = vmatpush2.msra.mxu0 0.0
          %944 = vmatprep.subr.mxu0 0.0
          %945 = vmatpush2.msra.mxu0 0.0
          %946 = vmatprep.subr.mxu0 0.0
          %947 = vmatpush2.msra.mxu0 0.0
          %948 = vmatprep.subr.mxu0 0.0
          %949 = vmatpush2.msra.mxu0 0.0
          %950 = vmatprep.subr.mxu0 0.0
          %951 = vmatpush2.msra.mxu0 0.0
          %952 = vmatprep.subr.mxu0 0.0
          %953 = vmatpush2.msra.mxu0 0.0
          %954 = vmatprep.subr.mxu0 0.0
          %955 = vmatpush2.msra.mxu0 0.0
          %956 = vmatprep.subr.mxu0 0.0
          %957 = vmatpush2.msra.mxu0 0.0
          %958 = vmatprep.subr.mxu0 0.0
          %959 = vmatpush2.msra.mxu0 0.0
          %960 = vmatprep.subr.mxu0 0.0
          %961 = vmatpush2.msra.mxu0 0.0
          %962 = vmatprep.subr.mxu0 0.0
          %963 = vmatpush2.msra.mxu0 0.0
          %964 = vmatprep.subr.mxu0 0.0
          %965 = vmatpush2.msra.mxu0 0.0
          %966 = vmatprep.subr.mxu0 0.0
          %967 = vmatpush2.msra.mxu0 0.0
          %968 = vmatprep.subr.mxu0 0.0
          %969 = vmatpush2.msra.mxu0 0.0
          %970 = vmatprep.subr.mxu0 0.0
          %971 = vmatpush2.msra.mxu0 0.0
          %972 = vmatprep.subr.mxu0 0.0
          %973 = vmatpush2.msra.mxu0 0.0
          %974 = vmatprep.mubr.f32.mxu0 0.0
          %975 = vmatmul.mubr.f32.gmra.mxu0 %v878
          %v976 = vpop.f32.mrf.mxu0
          %v977 = vadd.f32 0.0, %v976
          %v978 = vpop.f32.mrf.mxu0
          %979 = vmatprep.mubr.f32.mxu0 0.0
          %980 = vmatmul.mubr.f32.gmra.mxu0 %v879
          %v981 = vpop.f32.mrf.mxu0
          %v982 = vadd.f32 0.0, %v981
          %v983 = vpop.f32.mrf.mxu0
          %984 = vmatprep.mubr.f32.mxu0 0.0
          %985 = vmatmul.mubr.f32.gmra.mxu0 %v880
          %v986 = vpop.f32.mrf.mxu0
          %v987 = vadd.f32 0.0, %v986
          %v988 = vpop.f32.mrf.mxu0
          %989 = vmatprep.mubr.f32.mxu0 0.0
          %990 = vmatmul.mubr.f32.gmra.mxu0 %v881
          %v991 = vpop.f32.mrf.mxu0
          %v992 = vadd.f32 0.0, %v991
          %v993 = vpop.f32.mrf.mxu0
          %994 = vmatprep.mubr.f32.mxu0 0.0
          %995 = vmatmul.mubr.f32.gmra.mxu0 %v882
          %v996 = vpop.f32.mrf.mxu0
          %v997 = vadd.f32 0.0, %v996
          %v998 = vpop.f32.mrf.mxu0
          %999 = vmatprep.mubr.f32.mxu0 0.0
          %1000 = vmatmul.mubr.f32.gmra.mxu0 %v883
          %v1001 = vpop.f32.mrf.mxu0
          %v1002 = vadd.f32 0.0, %v1001
          %v1003 = vpop.f32.mrf.mxu0
          %1004 = vmatprep.mubr.f32.mxu0 0.0
          %1005 = vmatmul.mubr.f32.gmra.mxu0 %v884
          %v1006 = vpop.f32.mrf.mxu0
          %v1007 = vadd.f32 0.0, %v1006
          %v1008 = vpop.f32.mrf.mxu0
          %1009 = vmatprep.mubr.f32.mxu0 0.0
          %1010 = vmatmul.mubr.f32.gmra.mxu0 %v885
          %v1011 = vpop.f32.mrf.mxu0
          %v1012 = vadd.f32 0.0, %v1011
          %v1013 = vpop.f32.mrf.mxu0
          %1014 = vmatprep.mubr.f32.mxu0 0.0
          %1015 = vmatmul.mubr.f32.gmra.mxu0 %v886
          %v1016 = vpop.f32.mrf.mxu0
          %v1017 = vadd.f32 0.0, %v1016
          %v1018 = vpop.f32.mrf.mxu0
          %1019 = vmatprep.mubr.f32.mxu0 0.0
          %1020 = vmatmul.mubr.f32.gmra.mxu0 %v887
          %v1021 = vpop.f32.mrf.mxu0
          %v1022 = vadd.f32 0.0, %v1021
          %v1023 = vpop.f32.mrf.mxu0
          %1024 = vmatprep.mubr.f32.mxu0 0.0
          %1025 = vmatmul.mubr.f32.gmra.mxu0 %v888
          %v1026 = vpop.f32.mrf.mxu0
          %v1027 = vadd.f32 0.0, %v1026
          %v1028 = vpop.f32.mrf.mxu0
          %1029 = vmatprep.mubr.f32.mxu0 0.0
          %1030 = vmatmul.mubr.f32.gmra.mxu0 %v889
          %v1031 = vpop.f32.mrf.mxu0
          %v1032 = vadd.f32 0.0, %v1031
          %v1033 = vpop.f32.mrf.mxu0
          %1034 = vmatprep.mubr.f32.mxu0 0.0
          %1035 = vmatmul.mubr.f32.gmra.mxu0 %v890
          %v1036 = vpop.f32.mrf.mxu0
          %v1037 = vadd.f32 0.0, %v1036
          %v1038 = vpop.f32.mrf.mxu0
          %1039 = vmatprep.mubr.f32.mxu0 0.0
          %1040 = vmatmul.mubr.f32.gmra.mxu0 %v891
          %v1041 = vpop.f32.mrf.mxu0
          %v1042 = vadd.f32 0.0, %v1041
          %v1043 = vpop.f32.mrf.mxu0
          %1044 = vmatprep.mubr.f32.mxu0 0.0
          %1045 = vmatmul.mubr.f32.gmra.mxu0 %v892
          %v1046 = vpop.f32.mrf.mxu0
          %v1047 = vadd.f32 0.0, %v1046
          %v1048 = vpop.f32.mrf.mxu0
          %1049 = vmatprep.mubr.f32.mxu0 0.0
          %1050 = vmatmul.mubr.f32.gmra.mxu0 %v893
          %v1051 = vpop.f32.mrf.mxu0
          %v1052 = vadd.f32 0.0, %v1051
          %v1053 = vpop.f32.mrf.mxu0
          %1054 = vdwg.mxu0
          %v1055 = vadd.f32 %v800, %v977
          %v1056 = vadd.f32 %v805, %v982
          %v1057 = vadd.f32 %v810, %v987
          %v1058 = vadd.f32 %v815, %v992
          %v1059 = vadd.f32 %v820, %v997
          %v1060 = vadd.f32 %v825, %v1002
          %v1061 = vadd.f32 %v830, %v1007
          %v1062 = vadd.f32 %v835, %v1012
          %v1063 = vadd.f32 %v840, %v1017
          %v1064 = vadd.f32 %v845, %v1022
          %v1065 = vadd.f32 %v850, %v1027
          %v1066 = vadd.f32 %v855, %v1032
          %v1067 = vadd.f32 %v860, %v1037
          %v1068 = vadd.f32 %v865, %v1042
          %v1069 = vadd.f32 %v870, %v1047
          %v1070 = vadd.f32 %v875, %v1052
          %v1071 = vmul.f32 %v1055, %v1055
          %v1072 = vmul.f32 %v1056, %v1056
          %v1073 = vmul.f32 %v1057, %v1057
          %v1074 = vmul.f32 %v1058, %v1058
          %v1075 = vmul.f32 %v1059, %v1059
          %v1076 = vmul.f32 %v1060, %v1060
          %v1077 = vmul.f32 %v1061, %v1061
          %v1078 = vmul.f32 %v1062, %v1062
          %v1079 = vmul.f32 %v1063, %v1063
          %v1080 = vmul.f32 %v1064, %v1064
          %v1081 = vmul.f32 %v1065, %v1065
          %v1082 = vmul.f32 %v1066, %v1066
          %v1083 = vmul.f32 %v1067, %v1067
          %v1084 = vmul.f32 %v1068, %v1068
          %v1085 = vmul.f32 %v1069, %v1069
          %v1086 = vmul.f32 %v1070, %v1070
          %1087 = vadd.xlane.f32.xlu0 %v1071
          %v1088 = vpop.xlane.xlu0 %1087
          %1089 = vadd.xlane.f32.xlu0 %v1072
          %v1090 = vpop.xlane.xlu0 %1089
          %1091 = vadd.xlane.f32.xlu0 %v1073
          %v1092 = vpop.xlane.xlu0 %1091
          %1093 = vadd.xlane.f32.xlu0 %v1074
          %v1094 = vpop.xlane.xlu0 %1093
          %1095 = vadd.xlane.f32.xlu0 %v1075
          %v1096 = vpop.xlane.xlu0 %1095
          %1097 = vadd.xlane.f32.xlu0 %v1076
          %v1098 = vpop.xlane.xlu0 %1097
          %1099 = vadd.xlane.f32.xlu0 %v1077
          %v1100 = vpop.xlane.xlu0 %1099
          %1101 = vadd.xlane.f32.xlu0 %v1078
          %v1102 = vpop.xlane.xlu0 %1101
          %1103 = vadd.xlane.f32.xlu0 %v1079
          %v1104 = vpop.xlane.xlu0 %1103
          %1105 = vadd.xlane.f32.xlu0 %v1080
          %v1106 = vpop.xlane.xlu0 %1105
          %1107 = vadd.xlane.f32.xlu0 %v1081
          %v1108 = vpop.xlane.xlu0 %1107
          %1109 = vadd.xlane.f32.xlu0 %v1082
          %v1110 = vpop.xlane.xlu0 %1109
          %1111 = vadd.xlane.f32.xlu0 %v1083
          %v1112 = vpop.xlane.xlu0 %1111
          %1113 = vadd.xlane.f32.xlu0 %v1084
          %v1114 = vpop.xlane.xlu0 %1113
          %1115 = vadd.xlane.f32.xlu0 %v1085
          %v1116 = vpop.xlane.xlu0 %1115
          %1117 = vadd.xlane.f32.xlu0 %v1086
          %v1118 = vpop.xlane.xlu0 %1117
          %v1119 = vmax.f32 %v1088, 1e-24
          %v1120 = vmax.f32 %v1090, 1e-24
          %v1121 = vmax.f32 %v1092, 1e-24
          %v1122 = vmax.f32 %v1094, 1e-24
          %v1123 = vmax.f32 %v1096, 1e-24
          %v1124 = vmax.f32 %v1098, 1e-24
          %v1125 = vmax.f32 %v1100, 1e-24
          %v1126 = vmax.f32 %v1102, 1e-24
          %v1127 = vmax.f32 %v1104, 1e-24
          %v1128 = vmax.f32 %v1106, 1e-24
          %v1129 = vmax.f32 %v1108, 1e-24
          %v1130 = vmax.f32 %v1110, 1e-24
          %v1131 = vmax.f32 %v1112, 1e-24
          %v1132 = vmax.f32 %v1114, 1e-24
          %v1133 = vmax.f32 %v1116, 1e-24
          %v1134 = vmax.f32 %v1118, 1e-24
          %v1135 = vrsqrt.pop %v1119
          %v1136 = vrsqrt.pop %v1120
          %v1137 = vrsqrt.pop %v1121
          %v1138 = vrsqrt.pop %v1122
          %v1139 = vrsqrt.pop %v1123
          %v1140 = vrsqrt.pop %v1124
          %v1141 = vrsqrt.pop %v1125
          %v1142 = vrsqrt.pop %v1126
          %v1143 = vrsqrt.pop %v1127
          %v1144 = vrsqrt.pop %v1128
          %v1145 = vrsqrt.pop %v1129
          %v1146 = vrsqrt.pop %v1130
          %v1147 = vrsqrt.pop %v1131
          %v1148 = vrsqrt.pop %v1132
          %v1149 = vrsqrt.pop %v1133
          %v1150 = vrsqrt.pop %v1134
          %v1151 = vmul.f32 %v1055, %v1135
          %v1152 = vmul.f32 %v1056, %v1136
          %v1153 = vmul.f32 %v1057, %v1137
          %v1154 = vmul.f32 %v1058, %v1138
          %v1155 = vmul.f32 %v1059, %v1139
          %v1156 = vmul.f32 %v1060, %v1140
          %v1157 = vmul.f32 %v1061, %v1141
          %v1158 = vmul.f32 %v1062, %v1142
          %v1159 = vmul.f32 %v1063, %v1143
          %v1160 = vmul.f32 %v1064, %v1144
          %v1161 = vmul.f32 %v1065, %v1145
          %v1162 = vmul.f32 %v1066, %v1146
          %v1163 = vmul.f32 %v1067, %v1147
          %v1164 = vmul.f32 %v1068, %v1148
          %v1165 = vmul.f32 %v1069, %v1149
          %v1166 = vmul.f32 %v1070, %v1150
          %1167 = vst [vmem:[%s391] sm:$0xff] %v1151
          %1168 = vst [vmem:[%s391 + $0x8] sm:$0xff] %v1152
          %1169 = vst [vmem:[%s391 + $0x10] sm:$0xff] %v1153
          %1170 = vst [vmem:[%s391 + $0x18] sm:$0xff] %v1154
          %1171 = vst [vmem:[%s391 + $0x20] sm:$0xff] %v1155
          %1172 = vst [vmem:[%s391 + $0x28] sm:$0xff] %v1156
          %1173 = vst [vmem:[%s391 + $0x30] sm:$0xff] %v1157
          %1174 = vst [vmem:[%s391 + $0x38] sm:$0xff] %v1158
          %1175 = vst [vmem:[%s391 + $0x40] sm:$0xff] %v1159
          %1176 = vst [vmem:[%s391 + $0x48] sm:$0xff] %v1160
          %1177 = vst [vmem:[%s391 + $0x50] sm:$0xff] %v1161
          %1178 = vst [vmem:[%s391 + $0x58] sm:$0xff] %v1162
          %1179 = vst [vmem:[%s391 + $0x60] sm:$0xff] %v1163
          %1180 = vst [vmem:[%s391 + $0x68] sm:$0xff] %v1164
          %1181 = vst [vmem:[%s391 + $0x70] sm:$0xff] %v1165
          %1182 = vst [vmem:[%s391 + $0x78] sm:$0xff] %v1166
        $region72: #{tpu_custom_call.1} parent=43 // pred_fallthru
          _
        %s1183 = sand.u32 %s190, 1
        %s1184 = scalar_lea.sflag [#allocation5], %s1183
        %s1185 = sand.u32 %s190, 1
        %s1186 = smul.addr %s1185, 128
        %s1187 = scalar_lea.vmem [#allocation12], %s1186
        // Predicated region
        $region73: #{tpu_custom_call.1} parent=43 // pred_check
          %p1188 = pneg %p200
        $region74: #{tpu_custom_call.1} parent=43 // pred_check_branch
          %1190 = sbr.rel (%p1188) target = $region76
        $region75: #{tpu_custom_call.1} parent=43 // pred_region
          %s1191 = smul.u32 16, %s31
          %s1193 = ssub.s32 2048, 2048
          %1194 = vsyncadd %s1184, %s1193
          %s1195 = smul.addr %s1191, 128
          %s1196 = scalar_lea.hbm %s6, %s1195
          %s1197 = sshll.u32 %s1187, 4
          %s1198 = int_to_ptr.vmem [resolvable:$true] %s1197
          %1203 = dma.vmem_to_hbm [thread:$0]  %s1198, 2048, %s1196, %s1184, 128, 128, 8
        $region76: #{tpu_custom_call.1} parent=43 // pred_fallthru
          _
      $region44: #{tpu_custom_call.1} parent=5 // pred_fallthru
        _
      %p1204 = scmp.le.s32.totalorder 2, %s22
      // Predicated region
      $region77: #{tpu_custom_call.1} parent=5 // pred_check
        %p1205 = pneg %p1204
      $region78: #{tpu_custom_call.1} parent=5 // pred_check_branch
        %1207 = sbr.rel (%p1205) target = $region80
      $region79: #{tpu_custom_call.1} parent=5 // pred_region
        %s1208 = ssub.s32 %s22, 2
        // Predicated region
        $region81: #{tpu_custom_call.1} parent=79 // pred_check
          %p1209 = pneg %p206
        $region82: #{tpu_custom_call.1} parent=79 // pred_check_branch
          %1211 = sbr.rel (%p1209) target = $region84
        $region83: #{tpu_custom_call.1} parent=79 // pred_region
          %s1212 = sand.u32 %s191, 1
          %s1213 = scalar_lea.sflag [#allocation5], %s1212
          %s1214 = sand.u32 %s191, 1
          %s1215 = smul.addr %s1214, 128
          %s1216 = scalar_lea.vmem [#allocation12], %s1215
          %1217 = dma.done %s1213, 2048
        $region84: #{tpu_custom_call.1} parent=79 // pred_fallthru
          _
      $region80: #{tpu_custom_call.1} parent=5 // pred_fallthru
        _
    $region6: #{tpu_custom_call.1} parent=1 // loop_footer
      %s26 = sadd.s32 1, %s22
    $region7: #{tpu_custom_call.1} parent=1 // loop_footer_branch
      %21 = sbr.rel target = $region3
    $region8: #{tpu_custom_call.1} parent=1 // loop_exit
      _
    %1218 = vsyncpa [#allocation4], 1
    %s1219 = scalar_lea.sflag [#allocation4], 1
    %1220 = vsyncpa %s1219, 1
    %1221 = vsyncpa [#allocation7], 1
    %s1222 = scalar_lea.sflag [#allocation7], 1
    %1223 = vsyncpa %s1222, 1
    %1224 = vsyncpa [#allocation10], 1
    %1225 = vsyncpa [#allocation5], 1
    %s1226 = scalar_lea.sflag [#allocation5], 1
    %1227 = vsyncpa %s1226, 1

</llo_original>
